<compile_context>
chip_gen: v7x
topology: tpu7x:2x2x1
jax: 0.10.0
libtpu: 0.0.40
codegen_flags: <defaults>
</compile_context>

<pallas_src>
import math
import functools

import numpy as np
import jax
import jax.numpy as jnp
from jax.experimental import pallas as pl
from jax.experimental.pallas import tpu as pltpu


# ----------------------------- Pallas kernel -------------------------------

def hartley_pool_kernel(x_ref, m_ref, o_ref, acc_ref, *, n_k):
    # x_ref: (tile_n, tk) f32   m_ref: (tk, P) f32/bf16   o_ref: (tile_n, P) f32
    # acc_ref: (tile_n, P) f32 scratch (used only when the K axis is tiled)
    x = x_ref[...]
    m = m_ref[...]
    if m.dtype != x.dtype:            # bf16 operator (very large images only)
        x = x.astype(m.dtype)

    if n_k == 1:
        # Entire fused operator in one block: a single MXU matmul, f32 accumulate.
        o_ref[...] = jnp.dot(x, m, preferred_element_type=jnp.float32
                             ).astype(o_ref.dtype)
    else:
        k = pl.program_id(1)

        @pl.when(k == 0)
        def _():
            acc_ref[...] = jnp.zeros_like(acc_ref)

        acc_ref[...] += jnp.dot(x, m, preferred_element_type=jnp.float32)

        @pl.when(k == n_k - 1)
        def _():
            o_ref[...] = acc_ref[...].astype(o_ref.dtype)


# ------------------------- operator construction ---------------------------

def _cas_factors(n):
    # cos/sin of 2*pi*k*m/n with k*m reduced mod n in integer arithmetic
    # (exact), evaluated in f64 on host.
    k = np.arange(n, dtype=np.int64)
    prod = (np.outer(k, k) % n).astype(np.float64)
    ang = 2.0 * np.pi * prod / n
    return np.cos(ang), np.sin(ang)


def _crop_indices(size_in, size_out):
    # Mirrors PyTorch _spectral_crop corner selection (per axis).
    c = math.ceil(size_out / 2)
    head = list(range(c))
    if size_out % 2 == 1:
        tail = list(range(size_in - (c - 1), size_in))
    else:
        tail = list(range(size_in - c, size_in))
    return np.array(head + tail, dtype=np.int64)


def _build_fused_operator(H, W, oh, ow):
    """M (H*W, oh*ow) such that  out_flat = x_flat @ M  ==  DHT(crop(DHT(X)))."""
    cch, csh = _cas_factors(H)
    ccw, csw = _cas_factors(W)
    pw, mw = ccw + csw, ccw - csw

    cco, cso = _cas_factors(oh)
    ccwo, cswo = _cas_factors(ow)
    po, mo = ccwo + cswo, ccwo - cswo

    sh = np.eye(H, dtype=np.float64)[_crop_indices(H, oh)]     # (oh, H) selector
    sw = np.eye(W, dtype=np.float64)[_crop_indices(W, ow)]     # (ow, W) selector

    l1, l2 = cco @ sh, cso @ sh                                # (oh, H)
    r1, r2 = sw.T @ po, sw.T @ mo                              # (W, ow)

    a_terms = [l1 @ cch, l1 @ csh, l2 @ cch, l2 @ csh]         # 4 x (oh, H)
    b_terms = [pw @ r1, mw @ r1, pw @ r2, mw @ r2]             # 4 x (W, ow)

    m4 = np.zeros((H, W, oh, ow), dtype=np.float64)
    for a, b in zip(a_terms, b_terms):
        m4 += np.einsum('ih,wj->hwij', a, b)                   # sum_k A_k ⊗ B_k
    return m4.reshape(H * W, oh * ow)


# ----------------------------- tiling heuristics ---------------------------

def _round_up(v, m):
    return -(-v // m) * m


def _pick_k_tile(K, p_pad, itemsize):
    # Keep one (tk, P) operator block under ~4 MiB so it (double-buffered if
    # tiled, single-buffered if not) stays VMEM-resident on every generation.
    max_rows = (4 * 1024 * 1024) // (p_pad * itemsize)
    if K <= max_rows:
        return K
    return max(128, (max_rows // 128) * 128)


def _pick_tile_n(n, tk, p, op_block_bytes):
    # Lane-padded f32 VMEM bytes per image row: 2x double-buffered input block
    # (tile_n, tk), 2x output block (tile_n, P), 1x f32 accumulator scratch.
    tk_pad = _round_up(tk, 128)
    p_pad = _round_up(p, 128)
    per_row = 4 * (2 * tk_pad + 3 * p_pad)
    budget = 12 * 1024 * 1024                       # leaves headroom under 32 MiB
    avail = max(budget - op_block_bytes, 2 * 1024 * 1024)
    t = min(avail // per_row, 1024)
    t = max(8, (t // 8) * 8)                        # sublane-aligned block rows
    if t >= n:
        return int(n)
    steps = -(-n // t)
    if steps % 2 == 1:                              # v7x: keep both TCs busy
        steps += 1
        t = min(t, max(8, _round_up(-(-n // steps), 8)))
    return int(t)


# ----------------------------- glue / wrapper ------------------------------

def _as_pair(p):
    if isinstance(p, (tuple, list)):
        return int(p[0]), int(p[1])
    return int(p), int(p)


@functools.partial(jax.jit, static_argnames=("pool_size", "k_tile"))
def hartley_pool2d(x, pool_size, k_tile=None):
    """x: (B, C, H, W) float32 -> (B, C, oh, ow) float32."""
    oh, ow = _as_pair(pool_size)
    B, C, H, W = x.shape
    N, K, P = B * C, H * W, oh * ow
    p_pad = _round_up(P, 128)

    # Operator dtype: f32 while it comfortably fits VMEM (accuracy), bf16 only
    # for very large H*W*oh*ow.
    op_dtype = jnp.float32 if K * p_pad * 4 <= (6 << 20) else jnp.bfloat16
    itemsize = 4 if op_dtype == jnp.float32 else 2
    m = jnp.asarray(_build_fused_operator(H, W, oh, ow), dtype=op_dtype)  # (K, P)

    # K (=H*W) tiling so the operator block stays VMEM-resident for huge images.
    tk = min(int(k_tile), K) if k_tile is not None else _pick_k_tile(K, p_pad, itemsize)
    if tk < K and (tk % 128 != 0 or K % tk != 0):
        # TODO(synk): H*W not divisible by a 128-aligned K tile; keep a single
        # un-tiled K block (correct; may need a larger vmem limit for huge H*W).
        tk = K
    grid_k = K // tk

    op_block_bytes = (1 if grid_k == 1 else 2) * _round_up(tk, 8) * p_pad * itemsize
    tile_n = _pick_tile_n(N, tk, P, op_block_bytes)
    grid_n = -(-N // tile_n)            # no jnp.pad; Pallas handles the tail block

    xf = x.reshape(N, K).astype(jnp.float32)        # lane-dense, free reshape

    if grid_k == 1:
        # Constant operator block: never re-fetched -> single-buffered.
        op_spec = pl.BlockSpec((tk, P), lambda i, k: (0, 0),
                               pipeline_mode=pl.Buffered(1))
    else:
        op_spec = pl.BlockSpec((tk, P), lambda i, k: (k, 0))

    out = pl.pallas_call(
        functools.partial(hartley_pool_kernel, n_k=grid_k),
        out_shape=jax.ShapeDtypeStruct((N, P), jnp.float32),
        grid=(grid_n, grid_k),
        in_specs=[
            pl.BlockSpec((tile_n, tk), lambda i, k: (i, k)),
            op_spec,
        ],
        out_specs=pl.BlockSpec((tile_n, P), lambda i, k: (i, 0)),
        scratch_shapes=[pltpu.VMEM((tile_n, P), jnp.float32)],
        compiler_params=pltpu.CompilerParams(
            dimension_semantics=("parallel", "arbitrary"),
            vmem_limit_bytes=32 * 1024 * 1024),
    )(xf, m)

    return out.reshape(B, C, oh, ow)


# ------------------------------ reference ----------------------------------

def _dht_ref(x):
    f = jnp.fft.fft2(x)
    return jnp.real(f) - jnp.imag(f)


def _spectral_crop_ref(x, oh, ow):
    H, W = x.shape[-2:]
    ih = jnp.asarray(_crop_indices(H, oh))
    iw = jnp.asarray(_crop_indices(W, ow))
    return x[..., ih[:, None], iw[None, :]]


def hartley_pool2d_ref(x, pool_size):
    oh, ow = _as_pair(pool_size)
    return _dht_ref(_spectral_crop_ref(_dht_ref(x), oh, ow))


# -------------------------------- main --------------------------------------

if __name__ == "__main__":
    key = jax.random.PRNGKey(0)
    x = jax.random.normal(key, (2, 4, 16, 16), dtype=jnp.float32)

    pool_size = 8  # HartleyPool2d(pool_size=8) -> output (2, 4, 8, 8)

    y = hartley_pool2d(x, pool_size=pool_size)
    y = jax.block_until_ready(y)
    y_ref = hartley_pool2d_ref(x, pool_size)

    assert y.shape == (2, 4, 8, 8), y.shape
    err = float(jnp.max(jnp.abs(y - y_ref)))
    scale = float(jnp.max(jnp.abs(y_ref)))
    assert err <= 1e-2 * scale + 1e-3, (err, scale)

    # Also exercise the K-tiled accumulator path (grid_k > 1) at the same shape.
    y2 = jax.block_until_ready(hartley_pool2d(x, pool_size=pool_size, k_tile=128))
    err2 = float(jnp.max(jnp.abs(y2 - y_ref)))
    assert err2 <= 1e-2 * scale + 1e-3, (err2, scale)

    print("KERNEL_OK")
</pallas_src>

<mosaic_0001>
module attributes {stable_mosaic.version = 11 : i64} {
  func.func @hartley_pool_kernel(%arg0: i32, %arg1: i32, %arg2: memref<8x256xf32, #tpu.memory_space<vmem>>, %arg3: memref<256x64xf32, #tpu.memory_space<vmem>>, %arg4: memref<8x64xf32, #tpu.memory_space<vmem>>, %arg5: memref<8x64xf32, #tpu.memory_space<vmem>>) attributes {dimension_semantics = [#tpu.dimension_semantics<parallel>, #tpu.dimension_semantics<arbitrary>], iteration_bounds = array<i64: 1, 1>, scalar_prefetch = 0 : i64, scratch_operands = 1 : i64, tpu.core_type = #tpu.core_type<tc>, window_params = [{transform_indices = @transform_0, window_bounds = array<i64: 8, 256>}, {pipeline_mode = #tpu.pipeline_mode<synchronous>, transform_indices = @transform_1, window_bounds = array<i64: 256, 64>}, {transform_indices = @transform_2, window_bounds = array<i64: 8, 64>}]} {
    %c0 = arith.constant 0 : index
    %c0_0 = arith.constant 0 : index
    %0 = vector.load %arg2[%c0, %c0_0] : memref<8x256xf32, #tpu.memory_space<vmem>>, vector<8x256xf32>
    %c0_1 = arith.constant 0 : index
    %c0_2 = arith.constant 0 : index
    %1 = vector.load %arg3[%c0_1, %c0_2] : memref<256x64xf32, #tpu.memory_space<vmem>>, vector<256x64xf32>
    %cst = arith.constant dense<0.000000e+00> : vector<8x64xf32>
    %2 = tpu.matmul %0, %1, %cst {dimension_numbers = #tpu.dot_dimension_numbers<[1], [0], [0], [1], [0, 0, 1, 1], [], []>} : vector<8x256xf32>, vector<256x64xf32>, vector<8x64xf32> -> vector<8x64xf32>
    %c0_3 = arith.constant 0 : index
    %c0_4 = arith.constant 0 : index
    %3 = vector.load %arg4[%c0_3, %c0_4] : memref<8x64xf32, #tpu.memory_space<vmem>>, vector<8x64xf32>
    tpu.vector_store %arg4[%c0_3, %c0_4], %2 {strides = array<i32>} : memref<8x64xf32, #tpu.memory_space<vmem>>, vector<8x64xf32>,
    return
  }
  func.func @transform_0(%arg0: i32, %arg1: i32) -> (i32, i32) {
    %c0_i32 = arith.constant 0 : i32
    return %arg0, %arg1 : i32, i32
  }
  func.func @transform_1(%arg0: i32, %arg1: i32) -> (i32, i32) {
    %c0_i32 = arith.constant 0 : i32
    %c0_i32_0 = arith.constant 0 : i32
    %c0_i32_1 = arith.constant 0 : i32
    return %c0_i32, %c0_i32_0 : i32, i32
  }
  func.func @transform_2(%arg0: i32, %arg1: i32) -> (i32, i32) {
    %c0_i32 = arith.constant 0 : i32
    %c0_i32_0 = arith.constant 0 : i32
    return %arg0, %c0_i32 : i32, i32
  }
}

</mosaic_0001>

<llo_original>
// kernel: hartley_pool2d.1
$region0: #{hartley_pool2d.1}
  #allocation0 [shape = 'u32[]', space=smem, size = 0x4, offset = 0x4, fixed_abs, tag = 'smem constant byte address 0x4 - core index']
  #allocation1 [shape = 'u32[144,128]{1,0:T(1,128)}', space=vmem, size = 0x12000, scoped, tag = 'internal scratch']
  #allocation2 [shape = 'f32[8,64]{1,0:T(8,128)}', space=vmem, size = 0x1000, scoped, tag = 'scratch operand']
  %s0 = inlined_call_operand.vmem [shape: f32[8,256], index: 0, kind: input, shape index: {}]
  %s1 = inlined_call_operand.hbm [shape: f32[256,64], index: 1, kind: input, shape index: {}]
  %s2 = inlined_call_operand.vmem [shape: f32[8,64], index: 2, kind: output, shape index: {}]
  %s3 = sld [smem:[#allocation0]]
  $region22: #{hartley_pool2d.1} parent=0
    _
  %s5 = ssub.s32 1, %s3
  %s6 = scalar_select 0, %s5, %s3
  $region1: #{hartley_pool2d.1} parent=0
    #allocation3 [shape = 'u8[131072]{0}', space=vmem, size = 0x20000, scoped, tag = 'input window, operand 1, single buffered']
    #allocation4 [shape = 's32[1]{0}', space=sflag, size = 0x4, scoped, tag = 'scoped memory for hartley_pool2d.1']
    %7 = vsyncpa [#allocation4], 0
    // Predicated region
    $region2: #{hartley_pool2d.1} parent=1 // pred_check
      _
    $region3: #{hartley_pool2d.1} parent=1 // pred_check_branch
      %9 = sbr.rel (0) target = $region5
    $region4: #{hartley_pool2d.1} parent=1 // pred_region
      _
    $region5: #{hartley_pool2d.1} parent=1 // pred_fallthru
      _
    // Predicated region
    $region6: #{hartley_pool2d.1} parent=1 // pred_check
      _
    $region7: #{hartley_pool2d.1} parent=1 // pred_check_branch
      %11 = sbr.rel (0) target = $region9
    $region8: #{hartley_pool2d.1} parent=1 // pred_region
      %s13 = ssub.s32 4096, 4096
      %14 = vsyncadd [#allocation4], %s13
      %s15 = sshll.u32 [#allocation3], 4
      %s16 = int_to_ptr.vmem [resolvable:$true] %s15
      %21 = dma.hbm_to_vmem [thread:$0]  %s1, 4096, %s16, [#allocation4], 128, 128, 8
    $region9: #{hartley_pool2d.1} parent=1 // pred_fallthru
      _
    // Predicated region
    $region10: #{hartley_pool2d.1} parent=1 // pred_check
      _
    $region11: #{hartley_pool2d.1} parent=1 // pred_check_branch
      %23 = sbr.rel (0) target = $region13
    $region12: #{hartley_pool2d.1} parent=1 // pred_region
      %24 = dma.done [#allocation4], 4096
    $region13: #{hartley_pool2d.1} parent=1 // pred_fallthru
      _
    %v25 = vld [vmem:[%s0] sm:$0xff]
    %v26 = vld [vmem:[%s0 + $0x8] sm:$0xff]
    %v27 = vld [vmem:[#allocation3] sm:$0xff]
    %v28 = vld [vmem:[#allocation3 + $0x8] sm:$0xff]
    %v29 = vld [vmem:[#allocation3 + $0x10] sm:$0xff]
    %v30 = vld [vmem:[#allocation3 + $0x18] sm:$0xff]
    %v31 = vld [vmem:[#allocation3 + $0x20] sm:$0xff]
    %v32 = vld [vmem:[#allocation3 + $0x28] sm:$0xff]
    %v33 = vld [vmem:[#allocation3 + $0x30] sm:$0xff]
    %v34 = vld [vmem:[#allocation3 + $0x38] sm:$0xff]
    %v35 = vld [vmem:[#allocation3 + $0x40] sm:$0xff]
    %v36 = vld [vmem:[#allocation3 + $0x48] sm:$0xff]
    %v37 = vld [vmem:[#allocation3 + $0x50] sm:$0xff]
    %v38 = vld [vmem:[#allocation3 + $0x58] sm:$0xff]
    %v39 = vld [vmem:[#allocation3 + $0x60] sm:$0xff]
    %v40 = vld [vmem:[#allocation3 + $0x68] sm:$0xff]
    %v41 = vld [vmem:[#allocation3 + $0x70] sm:$0xff]
    %v42 = vld [vmem:[#allocation3 + $0x78] sm:$0xff]
    %v43 = vld [vmem:[#allocation3 + $0x80] sm:$0xff]
    %v44 = vld [vmem:[#allocation3 + $0x88] sm:$0xff]
    %v45 = vld [vmem:[#allocation3 + $0x90] sm:$0xff]
    %v46 = vld [vmem:[#allocation3 + $0x98] sm:$0xff]
    %v47 = vld [vmem:[#allocation3 + $0xa0] sm:$0xff]
    %v48 = vld [vmem:[#allocation3 + $0xa8] sm:$0xff]
    %v49 = vld [vmem:[#allocation3 + $0xb0] sm:$0xff]
    %v50 = vld [vmem:[#allocation3 + $0xb8] sm:$0xff]
    %v51 = vld [vmem:[#allocation3 + $0xc0] sm:$0xff]
    %v52 = vld [vmem:[#allocation3 + $0xc8] sm:$0xff]
    %v53 = vld [vmem:[#allocation3 + $0xd0] sm:$0xff]
    %v54 = vld [vmem:[#allocation3 + $0xd8] sm:$0xff]
    %v55 = vld [vmem:[#allocation3 + $0xe0] sm:$0xff]
    %v56 = vld [vmem:[#allocation3 + $0xe8] sm:$0xff]
    %v57 = vld [vmem:[#allocation3 + $0xf0] sm:$0xff]
    %v58 = vld [vmem:[#allocation3 + $0xf8] sm:$0xff]
    %59 = vmatprep.subr.mxu0 0.0
    %60 = vmatpush1.msra.mxu0 %v27
    %61 = vmatprep.subr.mxu0 0.0
    %62 = vmatpush1.msra.mxu0 %v28
    %63 = vmatprep.subr.mxu0 0.0
    %64 = vmatpush1.msra.mxu0 %v29
    %65 = vmatprep.subr.mxu0 0.0
    %66 = vmatpush1.msra.mxu0 %v30
    %67 = vmatprep.subr.mxu0 0.0
    %68 = vmatpush1.msra.mxu0 %v31
    %69 = vmatprep.subr.mxu0 0.0
    %70 = vmatpush1.msra.mxu0 %v32
    %71 = vmatprep.subr.mxu0 0.0
    %72 = vmatpush1.msra.mxu0 %v33
    %73 = vmatprep.subr.mxu0 0.0
    %74 = vmatpush1.msra.mxu0 %v34
    %75 = vmatprep.subr.mxu0 0.0
    %76 = vmatpush1.msra.mxu0 %v35
    %77 = vmatprep.subr.mxu0 0.0
    %78 = vmatpush1.msra.mxu0 %v36
    %79 = vmatprep.subr.mxu0 0.0
    %80 = vmatpush1.msra.mxu0 %v37
    %81 = vmatprep.subr.mxu0 0.0
    %82 = vmatpush1.msra.mxu0 %v38
    %83 = vmatprep.subr.mxu0 0.0
    %84 = vmatpush1.msra.mxu0 %v39
    %85 = vmatprep.subr.mxu0 0.0
    %86 = vmatpush1.msra.mxu0 %v40
    %87 = vmatprep.subr.mxu0 0.0
    %88 = vmatpush1.msra.mxu0 %v41
    %89 = vmatprep.subr.mxu0 0.0
    %90 = vmatpush1.msra.mxu0 %v42
    %91 = vmatprep.subr.mxu0 0.0
    %92 = vmatpush1.msra.mxu0 %v43
    %93 = vmatprep.subr.mxu0 0.0
    %94 = vmatpush1.msra.mxu0 %v44
    %95 = vmatprep.subr.mxu0 0.0
    %96 = vmatpush1.msra.mxu0 %v45
    %97 = vmatprep.subr.mxu0 0.0
    %98 = vmatpush1.msra.mxu0 %v46
    %99 = vmatprep.subr.mxu0 0.0
    %100 = vmatpush1.msra.mxu0 %v47
    %101 = vmatprep.subr.mxu0 0.0
    %102 = vmatpush1.msra.mxu0 %v48
    %103 = vmatprep.subr.mxu0 0.0
    %104 = vmatpush1.msra.mxu0 %v49
    %105 = vmatprep.subr.mxu0 0.0
    %106 = vmatpush1.msra.mxu0 %v50
    %107 = vmatprep.subr.mxu0 0.0
    %108 = vmatpush1.msra.mxu0 %v51
    %109 = vmatprep.subr.mxu0 0.0
    %110 = vmatpush1.msra.mxu0 %v52
    %111 = vmatprep.subr.mxu0 0.0
    %112 = vmatpush1.msra.mxu0 %v53
    %113 = vmatprep.subr.mxu0 0.0
    %114 = vmatpush1.msra.mxu0 %v54
    %115 = vmatprep.subr.mxu0 0.0
    %116 = vmatpush1.msra.mxu0 %v55
    %117 = vmatprep.subr.mxu0 0.0
    %118 = vmatpush1.msra.mxu0 %v56
    %119 = vmatprep.subr.mxu0 0.0
    %120 = vmatpush1.msra.mxu0 %v57
    %121 = vmatprep.subr.mxu0 0.0
    %122 = vmatpush1.msra.mxu0 %v58
    %123 = vmatprep.mubr.f32.mxu0 %v26
    %124 = vmatmul.mubr.f32.gmra.mrb[0].mxu0 %v25
    %v125 = vpop.f32.mrb[0].mxu0
    %v126 = vadd.f32 0.0, %v125
    %v127 = vpop.f32.mrb[0].mxu0
    %128 = vdwg.mxu0
    %vm129 = vcmask 523264
    %130 = vst.msk [vmem:[%s2] sm:$0xff] %vm129, %v126
    // Predicated region
    $region14: #{hartley_pool2d.1} parent=1 // pred_check
      _
    $region15: #{hartley_pool2d.1} parent=1 // pred_check_branch
      %132 = sbr.rel (0) target = $region17
    $region16: #{hartley_pool2d.1} parent=1 // pred_region
      _
    $region17: #{hartley_pool2d.1} parent=1 // pred_fallthru
      _
    // Predicated region
    $region18: #{hartley_pool2d.1} parent=1 // pred_check
      _
    $region19: #{hartley_pool2d.1} parent=1 // pred_check_branch
      %134 = sbr.rel (0) target = $region21
    $region20: #{hartley_pool2d.1} parent=1 // pred_region
      _
    $region21: #{hartley_pool2d.1} parent=1 // pred_fallthru
      _
    %135 = vsyncpa [#allocation4], 1

</llo_original>
